<compile_context>
chip_gen: v5e
topology: v5e:2x2
jax: 0.10.0
libtpu: 0.0.40
codegen_flags: <defaults>
</compile_context>

<pallas_src>
import functools
import math

import jax
import jax.numpy as jnp
from jax.experimental import pallas as pl
from jax.experimental.pallas import tpu as pltpu

LANE = 128            # TPU lane width: pad feature dims to multiples of this.
MAX_BATCH_TILE = 512  # rows per grid step (f32) -> near HBM-roofline streaming.
LN_EPS = 1e-5


def _round_up(x, m):
    return (x + m - 1) // m * m


def _pad2(a, rows, cols):
    pr, pc = rows - a.shape[0], cols - a.shape[1]
    if pr or pc:
        a = jnp.pad(a, ((0, pr), (0, pc)))
    return a


def _mlp_fused_kernel(real_dims, x_ref, *refs):
    """Whole MLP for one batch tile.  refs = (w, b, gamma, beta) * L + (out,)."""
    o_ref = refs[-1]
    h = x_ref[...]                                  # (TB, Dpad_in); padded cols are 0
    for li, d_real in enumerate(real_dims):
        w_ref, b_ref, g_ref, be_ref = refs[4 * li: 4 * li + 4]

        # Linear (MXU) + bias.  Zero-padded K rows of W make the padding exact.
        # (Casting h / w to bf16 here gives ~2x matmul on v6e/v7x if strict f32
        #  parity with torch is not required; kept f32 for parity.)
        y = jnp.dot(h, w_ref[...], preferred_element_type=jnp.float32) + b_ref[...]

        # ReLU (VPU).  Padded columns stay exactly 0.
        y = jnp.maximum(y, 0.0)

        # LayerNorm over the d_real real features (biased variance, eps=1e-5).
        d_pad = y.shape[-1]
        inv_n = jnp.float32(1.0 / d_real)
        mean = jnp.sum(y, axis=-1, keepdims=True) * inv_n       # pads contribute 0
        centered = y - mean
        if d_real != d_pad:
            col = jax.lax.broadcasted_iota(jnp.int32, y.shape, 1)
            cen_m = jnp.where(col < d_real, centered, 0.0)      # mask pads out of var
        else:
            cen_m = centered
        var = jnp.sum(cen_m * cen_m, axis=-1, keepdims=True) * inv_n
        y_hat = centered * jax.lax.rsqrt(var + jnp.float32(LN_EPS))

        # gamma/beta are zero in padded lanes -> padded activations reset to 0,
        # keeping the zero-padding invariant for the next layer.
        h = y_hat * g_ref[...] + be_ref[...]

    o_ref[...] = h


def fused_mlp_forward(x, params):
    """x: (B, obs_dim) f32; params: list of dicts {w_t (din,dout), b, gamma, beta}."""
    B, d_in = x.shape
    real_outs = tuple(int(p["w_t"].shape[1]) for p in params)
    din_pads = (_round_up(d_in, LANE),) + tuple(_round_up(d, LANE) for d in real_outs[:-1])
    dout_pads = tuple(_round_up(d, LANE) for d in real_outs)

    b8 = _round_up(B, 8)
    tb = min(MAX_BATCH_TILE, b8)
    b_pad = _round_up(b8, tb)

    x_p = _pad2(x.astype(jnp.float32), b_pad, din_pads[0])

    inputs = [x_p]
    in_specs = [pl.BlockSpec((tb, din_pads[0]), lambda i: (i, 0))]
    for li, p in enumerate(params):
        dk, dn = din_pads[li], dout_pads[li]
        inputs += [
            _pad2(p["w_t"].astype(jnp.float32), dk, dn),
            _pad2(p["b"].reshape(1, -1).astype(jnp.float32), 1, dn),
            _pad2(p["gamma"].reshape(1, -1).astype(jnp.float32), 1, dn),
            _pad2(p["beta"].reshape(1, -1).astype(jnp.float32), 1, dn),
        ]
        in_specs += [
            pl.BlockSpec((dk, dn), lambda i: (0, 0)),   # weights: VMEM-resident
            pl.BlockSpec((1, dn), lambda i: (0, 0)),
            pl.BlockSpec((1, dn), lambda i: (0, 0)),
            pl.BlockSpec((1, dn), lambda i: (0, 0)),
        ]

    dn_last = dout_pads[-1]
    param_bytes = 4 * sum(int(a.size) for a in inputs[1:])
    cost = pl.CostEstimate(
        flops=sum(2 * b_pad * k * n for k, n in zip(din_pads, dout_pads)),
        transcendentals=b_pad * len(params),            # one rsqrt per row per layer
        bytes_accessed=4 * (b_pad * din_pads[0] + b_pad * dn_last) + param_bytes,
    )

    out = pl.pallas_call(
        functools.partial(_mlp_fused_kernel, real_outs),
        out_shape=jax.ShapeDtypeStruct((b_pad, dn_last), jnp.float32),
        grid=(b_pad // tb,),
        in_specs=in_specs,
        out_specs=pl.BlockSpec((tb, dn_last), lambda i: (i, 0)),
        compiler_params=pltpu.CompilerParams(
            dimension_semantics=("parallel",),          # shard batch tiles across TCs
            vmem_limit_bytes=64 * 1024 * 1024,          # headroom for big batch tiles
        ),
        cost_estimate=cost,
    )(*inputs)

    return out[:B, : real_outs[-1]]


mlp_forward = jax.jit(fused_mlp_forward)


def make_mlp_params(key, in_dim, sizes):
    """Mirrors the module's __init__: orthogonal weights with ReLU gain sqrt(2),
    zero bias, LayerNorm gamma=1 / beta=0 for every hidden size."""
    params = []
    ortho = jax.nn.initializers.orthogonal(scale=math.sqrt(2.0))
    d_in = in_dim
    for d_out in sizes:
        key, wkey = jax.random.split(key)
        w = ortho(wkey, (d_out, d_in), jnp.float32)     # PyTorch layout (out, in)
        params.append(
            dict(
                w_t=jnp.transpose(w),                   # (d_in, d_out) for x @ W
                b=jnp.zeros((d_out,), jnp.float32),     # constant_bias=0.0
                gamma=jnp.ones((d_out,), jnp.float32),  # LayerNorm weight
                beta=jnp.zeros((d_out,), jnp.float32),  # LayerNorm bias
            )
        )
        d_in = d_out
    return params


def mlp_reference(x, params):
    """Pure-JAX reference of the module's forward (for a sanity check)."""
    h = x
    for p in params:
        y = jnp.maximum(h @ p["w_t"] + p["b"], 0.0)
        mean = jnp.mean(y, axis=-1, keepdims=True)
        var = jnp.mean((y - mean) ** 2, axis=-1, keepdims=True)
        h = (y - mean) * jax.lax.rsqrt(var + LN_EPS) * p["gamma"] + p["beta"]
    return h


if __name__ == "__main__":
    # Shapes consistent with the module: flat observation dim = 16,
    # config['nn.sizes'] = [32, 32], batch = 8.
    batch, obs_dim = 8, 16
    sizes = [32, 32]

    key = jax.random.PRNGKey(0)
    key, xkey, pkey = jax.random.split(key, 3)

    x = jax.random.normal(xkey, (batch, obs_dim), dtype=jnp.float32)
    params = make_mlp_params(pkey, obs_dim, sizes)

    out = mlp_forward(x, params)
    jax.block_until_ready(out)

    assert out.shape == (batch, sizes[-1])
    assert out.dtype == jnp.float32

    ref = mlp_reference(x, params)
    assert jnp.allclose(out, ref, atol=2e-3, rtol=2e-3), float(jnp.max(jnp.abs(out - ref)))

    print("KERNEL_OK")
</pallas_src>

<mosaic_0001>
module attributes {stable_mosaic.version = 11 : i64} {
  func.func @_mlp_fused_kernel(%arg0: i32, %arg1: memref<8x128xf32, #tpu.memory_space<vmem>>, %arg2: memref<128x128xf32, #tpu.memory_space<vmem>>, %arg3: memref<1x128xf32, #tpu.memory_space<vmem>>, %arg4: memref<1x128xf32, #tpu.memory_space<vmem>>, %arg5: memref<1x128xf32, #tpu.memory_space<vmem>>, %arg6: memref<128x128xf32, #tpu.memory_space<vmem>>, %arg7: memref<1x128xf32, #tpu.memory_space<vmem>>, %arg8: memref<1x128xf32, #tpu.memory_space<vmem>>, %arg9: memref<1x128xf32, #tpu.memory_space<vmem>>, %arg10: memref<8x128xf32, #tpu.memory_space<vmem>>) attributes {dimension_semantics = [#tpu.dimension_semantics<parallel>], iteration_bounds = array<i64: 1>, scalar_prefetch = 0 : i64, scratch_operands = 0 : i64, tpu.core_type = #tpu.core_type<tc>, window_params = [{transform_indices = @transform_0, window_bounds = array<i64: 8, 128>}, {pipeline_mode = #tpu.pipeline_mode<synchronous>, transform_indices = @transform_1, window_bounds = array<i64: 128, 128>}, {pipeline_mode = #tpu.pipeline_mode<synchronous>, transform_indices = @transform_2, window_bounds = array<i64: 1, 128>}, {pipeline_mode = #tpu.pipeline_mode<synchronous>, transform_indices = @transform_3, window_bounds = array<i64: 1, 128>}, {pipeline_mode = #tpu.pipeline_mode<synchronous>, transform_indices = @transform_4, window_bounds = array<i64: 1, 128>}, {pipeline_mode = #tpu.pipeline_mode<synchronous>, transform_indices = @transform_5, window_bounds = array<i64: 128, 128>}, {pipeline_mode = #tpu.pipeline_mode<synchronous>, transform_indices = @transform_6, window_bounds = array<i64: 1, 128>}, {pipeline_mode = #tpu.pipeline_mode<synchronous>, transform_indices = @transform_7, window_bounds = array<i64: 1, 128>}, {pipeline_mode = #tpu.pipeline_mode<synchronous>, transform_indices = @transform_8, window_bounds = array<i64: 1, 128>}, {transform_indices = @transform_9, window_bounds = array<i64: 8, 128>}]} {
    %c0 = arith.constant 0 : index
    %c0_0 = arith.constant 0 : index
    %0 = vector.load %arg1[%c0, %c0_0] : memref<8x128xf32, #tpu.memory_space<vmem>>, vector<8x128xf32>
    %c0_1 = arith.constant 0 : index
    %c0_2 = arith.constant 0 : index
    %1 = vector.load %arg2[%c0_1, %c0_2] : memref<128x128xf32, #tpu.memory_space<vmem>>, vector<128x128xf32>
    %cst = arith.constant dense<0.000000e+00> : vector<8x128xf32>
    %2 = tpu.matmul %0, %1, %cst {dimension_numbers = #tpu.dot_dimension_numbers<[1], [0], [0], [1], [0, 0, 1, 1], [], []>} : vector<8x128xf32>, vector<128x128xf32>, vector<8x128xf32> -> vector<8x128xf32>
    %c0_3 = arith.constant 0 : index
    %c0_4 = arith.constant 0 : index
    %3 = vector.load %arg3[%c0_3, %c0_4] : memref<1x128xf32, #tpu.memory_space<vmem>>, vector<1x128xf32>
    %4 = vector.broadcast %3 : vector<1x128xf32> to vector<8x128xf32>
    %5 = arith.addf %2, %4 : vector<8x128xf32>
    %cst_5 = arith.constant 0.000000e+00 : f32
    %6 = vector.broadcast %cst_5 : f32 to vector<8x128xf32>
    %7 = arith.maximumf %5, %6 : vector<8x128xf32>
    %cst_6 = arith.constant dense<0.000000e+00> : vector<8xf32>
    %8 = vector.multi_reduction <add>, %7, %cst_6 [1] : vector<8x128xf32> to vector<8xf32>
    %9 = vector.shape_cast %8 : vector<8xf32> to vector<8x1xf32>
    %cst_7 = arith.constant 3.125000e-02 : f32
    %10 = vector.broadcast %cst_7 : f32 to vector<8x1xf32>
    %11 = arith.mulf %9, %10 : vector<8x1xf32>
    %12 = vector.broadcast %11 : vector<8x1xf32> to vector<8x128xf32>
    %13 = arith.subf %7, %12 : vector<8x128xf32>
    %14 = tpu.iota {dimensions = array<i32: 1>} : vector<8x128xi32>
    %c32_i32 = arith.constant 32 : i32
    %15 = vector.broadcast %c32_i32 : i32 to vector<8x128xi32>
    %16 = arith.cmpi slt, %14, %15 : vector<8x128xi32>
    %cst_8 = arith.constant 0.000000e+00 : f32
    %17 = vector.broadcast %cst_8 : f32 to vector<8x128xf32>
    %18 = arith.select %16, %13, %17 : vector<8x128xi1>, vector<8x128xf32>
    %19 = arith.mulf %18, %18 : vector<8x128xf32>
    %cst_9 = arith.constant dense<0.000000e+00> : vector<8xf32>
    %20 = vector.multi_reduction <add>, %19, %cst_9 [1] : vector<8x128xf32> to vector<8xf32>
    %21 = vector.shape_cast %20 : vector<8xf32> to vector<8x1xf32>
    %cst_10 = arith.constant 3.125000e-02 : f32
    %22 = vector.broadcast %cst_10 : f32 to vector<8x1xf32>
    %23 = arith.mulf %21, %22 : vector<8x1xf32>
    %cst_11 = arith.constant 9.99999974E-6 : f32
    %24 = vector.broadcast %cst_11 : f32 to vector<8x1xf32>
    %25 = arith.addf %23, %24 : vector<8x1xf32>
    %26 = math.rsqrt %25 : vector<8x1xf32>
    %27 = vector.broadcast %26 : vector<8x1xf32> to vector<8x128xf32>
    %28 = arith.mulf %13, %27 : vector<8x128xf32>
    %c0_12 = arith.constant 0 : index
    %c0_13 = arith.constant 0 : index
    %29 = vector.load %arg4[%c0_12, %c0_13] : memref<1x128xf32, #tpu.memory_space<vmem>>, vector<1x128xf32>
    %30 = vector.broadcast %29 : vector<1x128xf32> to vector<8x128xf32>
    %31 = arith.mulf %28, %30 : vector<8x128xf32>
    %c0_14 = arith.constant 0 : index
    %c0_15 = arith.constant 0 : index
    %32 = vector.load %arg5[%c0_14, %c0_15] : memref<1x128xf32, #tpu.memory_space<vmem>>, vector<1x128xf32>
    %33 = vector.broadcast %32 : vector<1x128xf32> to vector<8x128xf32>
    %34 = arith.addf %31, %33 : vector<8x128xf32>
    %c0_16 = arith.constant 0 : index
    %c0_17 = arith.constant 0 : index
    %35 = vector.load %arg6[%c0_16, %c0_17] : memref<128x128xf32, #tpu.memory_space<vmem>>, vector<128x128xf32>
    %cst_18 = arith.constant dense<0.000000e+00> : vector<8x128xf32>
    %36 = tpu.matmul %34, %35, %cst_18 {dimension_numbers = #tpu.dot_dimension_numbers<[1], [0], [0], [1], [0, 0, 1, 1], [], []>} : vector<8x128xf32>, vector<128x128xf32>, vector<8x128xf32> -> vector<8x128xf32>
    %c0_19 = arith.constant 0 : index
    %c0_20 = arith.constant 0 : index
    %37 = vector.load %arg7[%c0_19, %c0_20] : memref<1x128xf32, #tpu.memory_space<vmem>>, vector<1x128xf32>
    %38 = vector.broadcast %37 : vector<1x128xf32> to vector<8x128xf32>
    %39 = arith.addf %36, %38 : vector<8x128xf32>
    %cst_21 = arith.constant 0.000000e+00 : f32
    %40 = vector.broadcast %cst_21 : f32 to vector<8x128xf32>
    %41 = arith.maximumf %39, %40 : vector<8x128xf32>
    %cst_22 = arith.constant dense<0.000000e+00> : vector<8xf32>
    %42 = vector.multi_reduction <add>, %41, %cst_22 [1] : vector<8x128xf32> to vector<8xf32>
    %43 = vector.shape_cast %42 : vector<8xf32> to vector<8x1xf32>
    %cst_23 = arith.constant 3.125000e-02 : f32
    %44 = vector.broadcast %cst_23 : f32 to vector<8x1xf32>
    %45 = arith.mulf %43, %44 : vector<8x1xf32>
    %46 = vector.broadcast %45 : vector<8x1xf32> to vector<8x128xf32>
    %47 = arith.subf %41, %46 : vector<8x128xf32>
    %48 = tpu.iota {dimensions = array<i32: 1>} : vector<8x128xi32>
    %c32_i32_24 = arith.constant 32 : i32
    %49 = vector.broadcast %c32_i32_24 : i32 to vector<8x128xi32>
    %50 = arith.cmpi slt, %48, %49 : vector<8x128xi32>
    %cst_25 = arith.constant 0.000000e+00 : f32
    %51 = vector.broadcast %cst_25 : f32 to vector<8x128xf32>
    %52 = arith.select %50, %47, %51 : vector<8x128xi1>, vector<8x128xf32>
    %53 = arith.mulf %52, %52 : vector<8x128xf32>
    %cst_26 = arith.constant dense<0.000000e+00> : vector<8xf32>
    %54 = vector.multi_reduction <add>, %53, %cst_26 [1] : vector<8x128xf32> to vector<8xf32>
    %55 = vector.shape_cast %54 : vector<8xf32> to vector<8x1xf32>
    %cst_27 = arith.constant 3.125000e-02 : f32
    %56 = vector.broadcast %cst_27 : f32 to vector<8x1xf32>
    %57 = arith.mulf %55, %56 : vector<8x1xf32>
    %cst_28 = arith.constant 9.99999974E-6 : f32
    %58 = vector.broadcast %cst_28 : f32 to vector<8x1xf32>
    %59 = arith.addf %57, %58 : vector<8x1xf32>
    %60 = math.rsqrt %59 : vector<8x1xf32>
    %61 = vector.broadcast %60 : vector<8x1xf32> to vector<8x128xf32>
    %62 = arith.mulf %47, %61 : vector<8x128xf32>
    %c0_29 = arith.constant 0 : index
    %c0_30 = arith.constant 0 : index
    %63 = vector.load %arg8[%c0_29, %c0_30] : memref<1x128xf32, #tpu.memory_space<vmem>>, vector<1x128xf32>
    %64 = vector.broadcast %63 : vector<1x128xf32> to vector<8x128xf32>
    %65 = arith.mulf %62, %64 : vector<8x128xf32>
    %c0_31 = arith.constant 0 : index
    %c0_32 = arith.constant 0 : index
    %66 = vector.load %arg9[%c0_31, %c0_32] : memref<1x128xf32, #tpu.memory_space<vmem>>, vector<1x128xf32>
    %67 = vector.broadcast %66 : vector<1x128xf32> to vector<8x128xf32>
    %68 = arith.addf %65, %67 : vector<8x128xf32>
    %c0_33 = arith.constant 0 : index
    %c0_34 = arith.constant 0 : index
    %69 = vector.load %arg10[%c0_33, %c0_34] : memref<8x128xf32, #tpu.memory_space<vmem>>, vector<8x128xf32>
    tpu.vector_store %arg10[%c0_33, %c0_34], %68 {strides = array<i32>} : memref<8x128xf32, #tpu.memory_space<vmem>>, vector<8x128xf32>,
    return
  }
  func.func @transform_0(%arg0: i32) -> (i32, i32) {
    %c0_i32 = arith.constant 0 : i32
    %c0_i32_0 = arith.constant 0 : i32
    return %arg0, %c0_i32 : i32, i32
  }
  func.func @transform_1(%arg0: i32) -> (i32, i32) {
    %c0_i32 = arith.constant 0 : i32
    %c0_i32_0 = arith.constant 0 : i32
    %c0_i32_1 = arith.constant 0 : i32
    return %c0_i32, %c0_i32_0 : i32, i32
  }
  func.func @transform_2(%arg0: i32) -> (i32, i32) {
    %c0_i32 = arith.constant 0 : i32
    %c0_i32_0 = arith.constant 0 : i32
    %c0_i32_1 = arith.constant 0 : i32
    return %c0_i32, %c0_i32_0 : i32, i32
  }
  func.func @transform_3(%arg0: i32) -> (i32, i32) {
    %c0_i32 = arith.constant 0 : i32
    %c0_i32_0 = arith.constant 0 : i32
    %c0_i32_1 = arith.constant 0 : i32
    return %c0_i32, %c0_i32_0 : i32, i32
  }
  func.func @transform_4(%arg0: i32) -> (i32, i32) {
    %c0_i32 = arith.constant 0 : i32
    %c0_i32_0 = arith.constant 0 : i32
    %c0_i32_1 = arith.constant 0 : i32
    return %c0_i32, %c0_i32_0 : i32, i32
  }
  func.func @transform_5(%arg0: i32) -> (i32, i32) {
    %c0_i32 = arith.constant 0 : i32
    %c0_i32_0 = arith.constant 0 : i32
    %c0_i32_1 = arith.constant 0 : i32
    return %c0_i32, %c0_i32_0 : i32, i32
  }
  func.func @transform_6(%arg0: i32) -> (i32, i32) {
    %c0_i32 = arith.constant 0 : i32
    %c0_i32_0 = arith.constant 0 : i32
    %c0_i32_1 = arith.constant 0 : i32
    return %c0_i32, %c0_i32_0 : i32, i32
  }
  func.func @transform_7(%arg0: i32) -> (i32, i32) {
    %c0_i32 = arith.constant 0 : i32
    %c0_i32_0 = arith.constant 0 : i32
    %c0_i32_1 = arith.constant 0 : i32
    return %c0_i32, %c0_i32_0 : i32, i32
  }
  func.func @transform_8(%arg0: i32) -> (i32, i32) {
    %c0_i32 = arith.constant 0 : i32
    %c0_i32_0 = arith.constant 0 : i32
    %c0_i32_1 = arith.constant 0 : i32
    return %c0_i32, %c0_i32_0 : i32, i32
  }
  func.func @transform_9(%arg0: i32) -> (i32, i32) {
    %c0_i32 = arith.constant 0 : i32
    %c0_i32_0 = arith.constant 0 : i32
    return %arg0, %c0_i32 : i32, i32
  }
}

</mosaic_0001>

<llo_original>
// kernel: fused_mlp_forward.1
$region0: #{fused_mlp_forward.1}
  #allocation0 [shape = 'u32[]', space=smem, size = 0x4, offset = 0x4, fixed_abs, tag = 'smem constant byte address 0x4 - core index']
  #allocation1 [shape = 'u32[72,128]{1,0:T(1,128)}', space=vmem, size = 0x9000, scoped, tag = 'internal scratch']
  %s0 = inlined_call_operand.vmem [shape: f32[8,128], index: 0, kind: input, shape index: {}]
  %s1 = inlined_call_operand.vmem [shape: f32[128,128], index: 1, kind: input, shape index: {}]
  %s2 = inlined_call_operand.vmem [shape: f32[1,128], index: 2, kind: input, shape index: {}]
  %s3 = inlined_call_operand.vmem [shape: f32[1,128], index: 3, kind: input, shape index: {}]
  %s4 = inlined_call_operand.vmem [shape: f32[1,128], index: 4, kind: input, shape index: {}]
  %s5 = inlined_call_operand.vmem [shape: f32[128,128], index: 5, kind: input, shape index: {}]
  %s6 = inlined_call_operand.vmem [shape: f32[1,128], index: 6, kind: input, shape index: {}]
  %s7 = inlined_call_operand.vmem [shape: f32[1,128], index: 7, kind: input, shape index: {}]
  %s8 = inlined_call_operand.vmem [shape: f32[1,128], index: 8, kind: input, shape index: {}]
  %s9 = inlined_call_operand.hbm [shape: f32[8,128], index: 9, kind: output, shape index: {}]
  %s10 = sld [smem:[#allocation0]]
  $region46: #{fused_mlp_forward.1} parent=0
    _
  %s12 = ssub.s32 1, %s10
  %s13 = scalar_select 0, %s12, %s10
  $region1: #{fused_mlp_forward.1} parent=0
    #allocation2 [shape = 'u8[4096]{0}', space=vmem, size = 0x1000, scoped, tag = 'output window, operand 0, single buffered']
    #allocation3 [shape = 's32[1]{0}', space=sflag, size = 0x4, scoped, tag = 'scoped memory for fused_mlp_forward.1']
    %14 = vsyncpa [#allocation3], 0
    // Predicated region
    $region2: #{fused_mlp_forward.1} parent=1 // pred_check
      _
    $region3: #{fused_mlp_forward.1} parent=1 // pred_check_branch
      %16 = sbr.rel (0) target = $region5
    $region4: #{fused_mlp_forward.1} parent=1 // pred_region
      _
    $region5: #{fused_mlp_forward.1} parent=1 // pred_fallthru
      _
    // Predicated region
    $region6: #{fused_mlp_forward.1} parent=1 // pred_check
      _
    $region7: #{fused_mlp_forward.1} parent=1 // pred_check_branch
      %18 = sbr.rel (0) target = $region9
    $region8: #{fused_mlp_forward.1} parent=1 // pred_region
      _
    $region9: #{fused_mlp_forward.1} parent=1 // pred_fallthru
      _
    // Predicated region
    $region10: #{fused_mlp_forward.1} parent=1 // pred_check
      _
    $region11: #{fused_mlp_forward.1} parent=1 // pred_check_branch
      %20 = sbr.rel (0) target = $region13
    $region12: #{fused_mlp_forward.1} parent=1 // pred_region
      _
    $region13: #{fused_mlp_forward.1} parent=1 // pred_fallthru
      _
    // Predicated region
    $region14: #{fused_mlp_forward.1} parent=1 // pred_check
      _
    $region15: #{fused_mlp_forward.1} parent=1 // pred_check_branch
      %22 = sbr.rel (0) target = $region17
    $region16: #{fused_mlp_forward.1} parent=1 // pred_region
      _
    $region17: #{fused_mlp_forward.1} parent=1 // pred_fallthru
      _
    // Predicated region
    $region18: #{fused_mlp_forward.1} parent=1 // pred_check
      _
    $region19: #{fused_mlp_forward.1} parent=1 // pred_check_branch
      %24 = sbr.rel (0) target = $region21
    $region20: #{fused_mlp_forward.1} parent=1 // pred_region
      _
    $region21: #{fused_mlp_forward.1} parent=1 // pred_fallthru
      _
    // Predicated region
    $region22: #{fused_mlp_forward.1} parent=1 // pred_check
      _
    $region23: #{fused_mlp_forward.1} parent=1 // pred_check_branch
      %26 = sbr.rel (0) target = $region25
    $region24: #{fused_mlp_forward.1} parent=1 // pred_region
      _
    $region25: #{fused_mlp_forward.1} parent=1 // pred_fallthru
      _
    // Predicated region
    $region26: #{fused_mlp_forward.1} parent=1 // pred_check
      _
    $region27: #{fused_mlp_forward.1} parent=1 // pred_check_branch
      %28 = sbr.rel (0) target = $region29
    $region28: #{fused_mlp_forward.1} parent=1 // pred_region
      _
    $region29: #{fused_mlp_forward.1} parent=1 // pred_fallthru
      _
    // Predicated region
    $region30: #{fused_mlp_forward.1} parent=1 // pred_check
      _
    $region31: #{fused_mlp_forward.1} parent=1 // pred_check_branch
      %30 = sbr.rel (0) target = $region33
    $region32: #{fused_mlp_forward.1} parent=1 // pred_region
      _
    $region33: #{fused_mlp_forward.1} parent=1 // pred_fallthru
      _
    // Predicated region
    $region34: #{fused_mlp_forward.1} parent=1 // pred_check
      _
    $region35: #{fused_mlp_forward.1} parent=1 // pred_check_branch
      %32 = sbr.rel (0) target = $region37
    $region36: #{fused_mlp_forward.1} parent=1 // pred_region
      _
    $region37: #{fused_mlp_forward.1} parent=1 // pred_fallthru
      _
    %v33 = vld [vmem:[%s0] sm:$0xff]
    %v34 = vld [vmem:[%s1] sm:$0xff]
    %v35 = vld [vmem:[%s1 + $0x8] sm:$0xff]
    %v36 = vld [vmem:[%s1 + $0x10] sm:$0xff]
    %v37 = vld [vmem:[%s1 + $0x18] sm:$0xff]
    %v38 = vld [vmem:[%s1 + $0x20] sm:$0xff]
    %v39 = vld [vmem:[%s1 + $0x28] sm:$0xff]
    %v40 = vld [vmem:[%s1 + $0x30] sm:$0xff]
    %v41 = vld [vmem:[%s1 + $0x38] sm:$0xff]
    %v42 = vld [vmem:[%s1 + $0x40] sm:$0xff]
    %v43 = vld [vmem:[%s1 + $0x48] sm:$0xff]
    %v44 = vld [vmem:[%s1 + $0x50] sm:$0xff]
    %v45 = vld [vmem:[%s1 + $0x58] sm:$0xff]
    %v46 = vld [vmem:[%s1 + $0x60] sm:$0xff]
    %v47 = vld [vmem:[%s1 + $0x68] sm:$0xff]
    %v48 = vld [vmem:[%s1 + $0x70] sm:$0xff]
    %v49 = vld [vmem:[%s1 + $0x78] sm:$0xff]
    %v50 = vld [vmem:[%s2] sm:$0x1]
    %v52 = vperm.slane %v50, 0
    %54 = vmatpush.msra.mxu0 %v49
    %55 = vmatpush.msra.mxu0 %v48
    %56 = vmatpush.msra.mxu0 %v47
    %57 = vmatpush.msra.mxu0 %v46
    %58 = vmatpush.msra.mxu0 %v45
    %59 = vmatpush.msra.mxu0 %v44
    %60 = vmatpush.msra.mxu0 %v43
    %61 = vmatpush.msra.mxu0 %v42
    %62 = vmatpush.msra.mxu0 %v41
    %63 = vmatpush.msra.mxu0 %v40
    %64 = vmatpush.msra.mxu0 %v39
    %65 = vmatpush.msra.mxu0 %v38
    %66 = vmatpush.msra.mxu0 %v37
    %67 = vmatpush.msra.mxu0 %v36
    %68 = vmatpush.msra.mxu0 %v35
    %69 = vmatpush.msra.mxu0 %v34
    %70 = vmatmul.f32.gmra.mxu0 %v33
    %v71 = vpop.f32.mrf.mxu0
    %v72 = vadd.f32 %v52, %v71
    %73 = vdwg.mxu0
    %v74 = vmax.f32 %v72, 0.0
    %75 = vadd.xlane.f32.xlu0 %v74
    %v76 = vpop.xlane.xlu0 %75
    %v77 = vmul.f32 %v76, 0.03125
    %v78 = vsub.f32 %v74, %v77
    %v79 = vlaneseq
    %v80 = vand.u32 %v79, 127
    %vm81 = vcmp.lt.s32.totalorder %v80, 32
    %v82 = vsel %vm81, %v78, 0.0
    %v83 = vmul.f32 %v82, %v82
    %84 = vadd.xlane.f32.xlu0 %v83
    %v85 = vpop.xlane.xlu0 %84
    %v86 = vmul.f32 %v85, 0.03125
    %v87 = vadd.f32 %v86, 1e-05
    %v88 = vrsqrt.pop %v87
    %v89 = vmul.f32 %v88, %v87
    %v90 = vmul.f32 %v89, %v88
    %v91 = vmul.f32 0.5, %v90
    %v92 = vsub.f32 1.5, %v91
    %v93 = vmul.f32 %v88, %v92
    %vm94 = vweird.f32 %v87
    %vm95 = vweird.f32 %v88
    %vm96 = vmor %vm94, %vm95
    %v97 = vsel %vm96, %v88, %v93
    %v98 = vmul.f32 %v78, %v97
    %v99 = vld [vmem:[%s3] sm:$0x1]
    %v101 = vperm.slane %v99, 0
    %v103 = vmul.f32 %v98, %v101
    %v104 = vld [vmem:[%s4] sm:$0x1]
    %v106 = vperm.slane %v104, 0
    %v108 = vadd.f32 %v103, %v106
    %v109 = vld [vmem:[%s5] sm:$0xff]
    %v110 = vld [vmem:[%s5 + $0x8] sm:$0xff]
    %v111 = vld [vmem:[%s5 + $0x10] sm:$0xff]
    %v112 = vld [vmem:[%s5 + $0x18] sm:$0xff]
    %v113 = vld [vmem:[%s5 + $0x20] sm:$0xff]
    %v114 = vld [vmem:[%s5 + $0x28] sm:$0xff]
    %v115 = vld [vmem:[%s5 + $0x30] sm:$0xff]
    %v116 = vld [vmem:[%s5 + $0x38] sm:$0xff]
    %v117 = vld [vmem:[%s5 + $0x40] sm:$0xff]
    %v118 = vld [vmem:[%s5 + $0x48] sm:$0xff]
    %v119 = vld [vmem:[%s5 + $0x50] sm:$0xff]
    %v120 = vld [vmem:[%s5 + $0x58] sm:$0xff]
    %v121 = vld [vmem:[%s5 + $0x60] sm:$0xff]
    %v122 = vld [vmem:[%s5 + $0x68] sm:$0xff]
    %v123 = vld [vmem:[%s5 + $0x70] sm:$0xff]
    %v124 = vld [vmem:[%s5 + $0x78] sm:$0xff]
    %v125 = vld [vmem:[%s6] sm:$0x1]
    %v127 = vperm.slane %v125, 0
    %129 = vmatpush.msra.mxu0 %v124
    %130 = vmatpush.msra.mxu0 %v123
    %131 = vmatpush.msra.mxu0 %v122
    %132 = vmatpush.msra.mxu0 %v121
    %133 = vmatpush.msra.mxu0 %v120
    %134 = vmatpush.msra.mxu0 %v119
    %135 = vmatpush.msra.mxu0 %v118
    %136 = vmatpush.msra.mxu0 %v117
    %137 = vmatpush.msra.mxu0 %v116
    %138 = vmatpush.msra.mxu0 %v115
    %139 = vmatpush.msra.mxu0 %v114
    %140 = vmatpush.msra.mxu0 %v113
    %141 = vmatpush.msra.mxu0 %v112
    %142 = vmatpush.msra.mxu0 %v111
    %143 = vmatpush.msra.mxu0 %v110
    %144 = vmatpush.msra.mxu0 %v109
    %145 = vmatmul.f32.gmra.mxu0 %v108
    %v146 = vpop.f32.mrf.mxu0
    %v147 = vadd.f32 %v127, %v146
    %148 = vdwg.mxu0
    %v149 = vmax.f32 %v147, 0.0
    %150 = vadd.xlane.f32.xlu0 %v149
    %v151 = vpop.xlane.xlu0 %150
    %v152 = vmul.f32 %v151, 0.03125
    %v153 = vsub.f32 %v149, %v152
    %v154 = vsel %vm81, %v153, 0.0
    %v155 = vmul.f32 %v154, %v154
    %156 = vadd.xlane.f32.xlu0 %v155
    %v157 = vpop.xlane.xlu0 %156
    %v158 = vmul.f32 %v157, 0.03125
    %v159 = vadd.f32 %v158, 1e-05
    %v160 = vrsqrt.pop %v159
    %v161 = vmul.f32 %v160, %v159
    %v162 = vmul.f32 %v161, %v160
    %v163 = vmul.f32 0.5, %v162
    %v164 = vsub.f32 1.5, %v163
    %v165 = vmul.f32 %v160, %v164
    %vm166 = vweird.f32 %v159
    %vm167 = vweird.f32 %v160
    %vm168 = vmor %vm166, %vm167
    %v169 = vsel %vm168, %v160, %v165
    %v170 = vmul.f32 %v153, %v169
    %v171 = vld [vmem:[%s7] sm:$0x1]
    %v173 = vperm.slane %v171, 0
    %v175 = vmul.f32 %v170, %v173
    %v176 = vld [vmem:[%s8] sm:$0x1]
    %v178 = vperm.slane %v176, 0
    %v180 = vadd.f32 %v175, %v178
    %181 = vst [vmem:[#allocation2] sm:$0xff] %v180
    // Predicated region
    $region38: #{fused_mlp_forward.1} parent=1 // pred_check
      _
    $region39: #{fused_mlp_forward.1} parent=1 // pred_check_branch
      %183 = sbr.rel (0) target = $region41
    $region40: #{fused_mlp_forward.1} parent=1 // pred_region
      %185 = vsyncadd [#allocation3], 0
      %s187 = sshll.u32 [#allocation2], 4
      %s188 = int_to_ptr.vmem [resolvable:$true] %s187
      %s189 = sshll.u32 %s9, 4
      %s190 = int_to_ptr.hbm [resolvable:$true] %s189
      %192 = dma.vmem_to_hbm [thread:$0]  %s188, 128, %s190, [#allocation3]
    $region41: #{fused_mlp_forward.1} parent=1 // pred_fallthru
      _
    // Predicated region
    $region42: #{fused_mlp_forward.1} parent=1 // pred_check
      _
    $region43: #{fused_mlp_forward.1} parent=1 // pred_check_branch
      %194 = sbr.rel (0) target = $region45
    $region44: #{fused_mlp_forward.1} parent=1 // pred_region
      %196 = dma.done [#allocation3], 128
    $region45: #{fused_mlp_forward.1} parent=1 // pred_fallthru
      _
    %197 = vsyncpa [#allocation3], 1

</llo_original>
